<compile_context>
chip_gen: v6e
topology: v6e:2x2x1
jax: 0.10.0
libtpu: 0.0.40
codegen_flags: <defaults>
</compile_context>

<pallas_src>
import functools

import jax
import jax.numpy as jnp
from jax.experimental import pallas as pl
from jax.experimental.pallas import tpu as pltpu


def _graph_agg_kernel(x_ref, w_ref, b_ref, out_ref, *, n_nodes, c_out, apply_tanh):
    # x_ref:   (b_tile*N, F)    w_ref: (F, 2*c_out)    b_ref: (1, 2*c_out)
    # out_ref: (b_tile, c_out)
    bt = out_ref.shape[0]

    # One fused projection matmul covering both branches and the whole batch tile.
    proj = jnp.dot(x_ref[...], w_ref[...],
                   preferred_element_type=jnp.float32) + b_ref[...]   # (bt*N, 2*out)

    gate = jax.nn.sigmoid(proj[:, :c_out])            # "i" branch  (EUP)
    feat = jnp.tanh(proj[:, c_out:])                  # "j" branch  (EUP)
    g = (gate * feat).reshape(bt, n_nodes, c_out)     # vreg-level relabel only
    y = jnp.sum(g, axis=1)                            # sum over nodes -> (bt, out)
    if apply_tanh:
        y = jnp.tanh(y)
    # TODO(synk): dropout is identity here (inference); training-mode dropout
    # would use pltpu.prng_seed + pltpu.stateful_bernoulli on y.
    out_ref[...] = y.astype(out_ref.dtype)


def _pick_b_tile(batch, n_nodes, feat_dim, c_out, budget_bytes=8 << 20):
    """Batch tile from a VMEM byte budget; multiple of 8 (or full batch) so all
    BlockSpecs obey the (8,128) tiling rule, and dividing the batch exactly."""
    per_graph = 4 * (n_nodes * feat_dim + c_out)        # f32 x rows + out row
    bt = max(1, budget_bytes // (2 * per_graph))        # double-buffered
    if bt >= batch:
        return batch
    if batch >= 16:                                     # keep >= 2 grid steps (megacore)
        bt = min(bt, batch // 2)
    bt = (bt // 8) * 8
    while bt >= 8:                                      # largest mult-of-8 divisor
        if batch % bt == 0:
            return bt
        bt -= 8
    return batch                                        # fallback: single step


def graph_aggregation(x, w_sig, b_sig, w_tanh, b_tanh, *, apply_tanh=True, b_tile=None):
    """x: (B, N, F) f32; w_*: (F, out) f32; b_*: (out,) f32  ->  (B, out) f32."""
    B, N, F = x.shape
    c_out = w_sig.shape[1]

    # Fuse both linears once at trace time (tiny tensors, outside the hot path).
    w_cat = jnp.concatenate([w_sig, w_tanh], axis=1)                  # (F, 2*out)
    b_cat = jnp.concatenate([b_sig, b_tanh], axis=0).reshape(1, 2 * c_out)

    # Flatten the node axis into the row axis so the kernel sees dense 2-D tiles.
    x2 = x.reshape(B * N, F)

    if b_tile is None:
        b_tile = _pick_b_tile(B, N, F, c_out)
    assert B % b_tile == 0

    kernel = functools.partial(_graph_agg_kernel, n_nodes=N, c_out=c_out,
                               apply_tanh=apply_tanh)

    cost = pl.CostEstimate(
        flops=2 * B * N * F * (2 * c_out) + 4 * B * N * c_out,
        transcendentals=2 * B * N * c_out + (B * c_out if apply_tanh else 0),
        bytes_accessed=4 * (B * N * F + F * 2 * c_out + 2 * c_out + B * c_out),
    )

    out = pl.pallas_call(
        kernel,
        out_shape=jax.ShapeDtypeStruct((B, c_out), x.dtype),
        grid_spec=pltpu.PrefetchScalarGridSpec(
            num_scalar_prefetch=0,
            grid=(B // b_tile,),
            in_specs=[
                pl.BlockSpec((b_tile * N, F), lambda b: (b, 0)),
                pl.BlockSpec((F, 2 * c_out), lambda b: (0, 0)),
                pl.BlockSpec((1, 2 * c_out), lambda b: (0, 0)),
            ],
            out_specs=pl.BlockSpec((b_tile, c_out), lambda b: (b, 0)),
        ),
        compiler_params=pltpu.CompilerParams(
            dimension_semantics=("parallel",)),
        cost_estimate=cost,
    )(x2, w_cat, b_cat)
    return out


if __name__ == "__main__":
    # Small, module-consistent shapes: B graphs, N atoms, F = in_features + n_atom_types.
    B, N = 4, 8
    in_features, n_atom_types, out_features = 24, 8, 128
    F = in_features + n_atom_types                      # 32

    key = jax.random.PRNGKey(0)
    kx, kws, kbs, kwt, kbt = jax.random.split(key, 5)

    x = jax.random.uniform(kx, (B, N, F), dtype=jnp.float32)

    # nn.Linear default init: U(-1/sqrt(fan_in), 1/sqrt(fan_in)). PyTorch stores
    # weight as (out, F); we store the transpose (F, out) so there is no
    # transpose anywhere in the hot path.
    bound = 1.0 / (F ** 0.5)
    w_sig = jax.random.uniform(kws, (F, out_features), minval=-bound, maxval=bound,
                               dtype=jnp.float32)
    b_sig = jax.random.uniform(kbs, (out_features,), minval=-bound, maxval=bound,
                               dtype=jnp.float32)
    w_tanh = jax.random.uniform(kwt, (F, out_features), minval=-bound, maxval=bound,
                                dtype=jnp.float32)
    b_tanh = jax.random.uniform(kbt, (out_features,), minval=-bound, maxval=bound,
                                dtype=jnp.float32)

    out = graph_aggregation(x, w_sig, b_sig, w_tanh, b_tanh, apply_tanh=True)
    out = jax.block_until_ready(out)

    # Pure-JAX reference (activation = tanh, dropout = identity / eval mode).
    i = jax.nn.sigmoid(x @ w_sig + b_sig)
    j = jnp.tanh(x @ w_tanh + b_tanh)
    ref = jnp.tanh(jnp.sum(i * j, axis=1))
    assert out.shape == (B, out_features)
    assert jnp.allclose(out, ref, atol=1e-4, rtol=1e-4), "mismatch vs reference"

    print("KERNEL_OK")
</pallas_src>

<mosaic_0001>
module attributes {stable_mosaic.version = 11 : i64} {
  func.func @_graph_agg_kernel(%arg0: i32, %arg1: memref<32x32xf32, #tpu.memory_space<vmem>>, %arg2: memref<32x256xf32, #tpu.memory_space<vmem>>, %arg3: memref<1x256xf32, #tpu.memory_space<vmem>>, %arg4: memref<4x128xf32, #tpu.memory_space<vmem>>) attributes {dimension_semantics = [#tpu.dimension_semantics<parallel>], iteration_bounds = array<i64: 1>, scalar_prefetch = 0 : i64, scratch_operands = 0 : i64, tpu.core_type = #tpu.core_type<tc>, window_params = [{transform_indices = @transform_0, window_bounds = array<i64: 32, 32>}, {pipeline_mode = #tpu.pipeline_mode<synchronous>, transform_indices = @transform_1, window_bounds = array<i64: 32, 256>}, {pipeline_mode = #tpu.pipeline_mode<synchronous>, transform_indices = @transform_2, window_bounds = array<i64: 1, 256>}, {transform_indices = @transform_3, window_bounds = array<i64: 4, 128>}]} {
    %c0 = arith.constant 0 : index
    %c0_0 = arith.constant 0 : index
    %0 = vector.load %arg1[%c0, %c0_0] : memref<32x32xf32, #tpu.memory_space<vmem>>, vector<32x32xf32>
    %c0_1 = arith.constant 0 : index
    %c0_2 = arith.constant 0 : index
    %1 = vector.load %arg2[%c0_1, %c0_2] : memref<32x256xf32, #tpu.memory_space<vmem>>, vector<32x256xf32>
    %cst = arith.constant dense<0.000000e+00> : vector<32x256xf32>
    %2 = tpu.matmul %0, %1, %cst {dimension_numbers = #tpu.dot_dimension_numbers<[1], [0], [0], [1], [0, 0, 1, 1], [], []>} : vector<32x32xf32>, vector<32x256xf32>, vector<32x256xf32> -> vector<32x256xf32>
    %c0_3 = arith.constant 0 : index
    %c0_4 = arith.constant 0 : index
    %3 = vector.load %arg3[%c0_3, %c0_4] : memref<1x256xf32, #tpu.memory_space<vmem>>, vector<1x256xf32>
    %4 = vector.broadcast %3 : vector<1x256xf32> to vector<32x256xf32>
    %5 = arith.addf %2, %4 : vector<32x256xf32>
    %6 = vector.extract_strided_slice %5 {offsets = [0, 0], sizes = [32, 128], strides = [1, 1]} : vector<32x256xf32> to vector<32x128xf32>
    %7 = arith.negf %6 : vector<32x128xf32>
    %8 = math.exp %7 : vector<32x128xf32>
    %cst_5 = arith.constant 1.000000e+00 : f32
    %9 = vector.broadcast %cst_5 : f32 to vector<32x128xf32>
    %10 = arith.addf %9, %8 : vector<32x128xf32>
    %11 = arith.divf %9, %10 : vector<32x128xf32>
    %12 = vector.extract_strided_slice %5 {offsets = [0, 128], sizes = [32, 128], strides = [1, 1]} : vector<32x256xf32> to vector<32x128xf32>
    %13 = math.tanh %12 : vector<32x128xf32>
    %14 = arith.mulf %11, %13 : vector<32x128xf32>
    %15 = vector.shape_cast %14 : vector<32x128xf32> to vector<4x8x128xf32>
    %cst_6 = arith.constant dense<0.000000e+00> : vector<4x128xf32>
    %16 = vector.multi_reduction <add>, %15, %cst_6 [1] : vector<4x8x128xf32> to vector<4x128xf32>
    %17 = math.tanh %16 : vector<4x128xf32>
    %c0_7 = arith.constant 0 : index
    %c0_8 = arith.constant 0 : index
    %18 = vector.load %arg4[%c0_7, %c0_8] : memref<4x128xf32, #tpu.memory_space<vmem>>, vector<4x128xf32>
    tpu.vector_store %arg4[%c0_7, %c0_8], %17 {strides = array<i32>} : memref<4x128xf32, #tpu.memory_space<vmem>>, vector<4x128xf32>,
    return
  }
  func.func @transform_0(%arg0: i32) -> (i32, i32) {
    %c0_i32 = arith.constant 0 : i32
    %c0_i32_0 = arith.constant 0 : i32
    return %arg0, %c0_i32 : i32, i32
  }
  func.func @transform_1(%arg0: i32) -> (i32, i32) {
    %c0_i32 = arith.constant 0 : i32
    %c0_i32_0 = arith.constant 0 : i32
    %c0_i32_1 = arith.constant 0 : i32
    return %c0_i32, %c0_i32_0 : i32, i32
  }
  func.func @transform_2(%arg0: i32) -> (i32, i32) {
    %c0_i32 = arith.constant 0 : i32
    %c0_i32_0 = arith.constant 0 : i32
    %c0_i32_1 = arith.constant 0 : i32
    return %c0_i32, %c0_i32_0 : i32, i32
  }
  func.func @transform_3(%arg0: i32) -> (i32, i32) {
    %c0_i32 = arith.constant 0 : i32
    %c0_i32_0 = arith.constant 0 : i32
    return %arg0, %c0_i32 : i32, i32
  }
}

</mosaic_0001>

<llo_original>
// kernel: tpu_custom_call.1
$region0: #{tpu_custom_call.1}
  #allocation0 [shape = 'u32[]', space=smem, size = 0x4, offset = 0x4, fixed_abs, tag = 'smem constant byte address 0x4 - core index']
  #allocation1 [shape = 'u32[144,128]{1,0:T(1,128)}', space=vmem, size = 0x12000, scoped, tag = 'internal scratch']
  %s0 = inlined_call_operand.hbm [shape: f32[32,32], index: 0, kind: input, shape index: {}]
  %s1 = inlined_call_operand.hbm [shape: f32[32,256], index: 1, kind: input, shape index: {}]
  %s2 = inlined_call_operand.vmem [shape: f32[1,256], index: 2, kind: input, shape index: {}]
  %s3 = inlined_call_operand.hbm [shape: f32[4,128], index: 3, kind: output, shape index: {}]
  %s4 = sld [smem:[#allocation0]]
  $region30: #{tpu_custom_call.1} parent=0
    _
  %s6 = ssub.s32 1, %s4
  %s7 = scalar_select 0, %s6, %s4
  $region1: #{tpu_custom_call.1} parent=0
    #allocation2 [shape = 'u8[16384]{0}', space=vmem, size = 0x4000, scoped, tag = 'input window, operand 0, single buffered']
    #allocation3 [shape = 's32[1]{0}', space=sflag, size = 0x4, scoped, tag = 'scoped memory for tpu_custom_call.1']
    #allocation4 [shape = 's32[1]{0}', space=sflag, size = 0x4, scoped, tag = 'scoped memory for tpu_custom_call.1']
    #allocation5 [shape = 'u8[32768]{0}', space=vmem, size = 0x8000, scoped, tag = 'input window, operand 1, single buffered']
    #allocation6 [shape = 's32[1]{0}', space=sflag, size = 0x4, scoped, tag = 'scoped memory for tpu_custom_call.1']
    #allocation7 [shape = 'u8[2048]{0}', space=vmem, size = 0x800, scoped, tag = 'output window, operand 0, single buffered']
    %8 = vsyncpa [#allocation3], 0
    %9 = vsyncpa [#allocation6], 0
    %10 = vsyncpa [#allocation4], 0
    // Predicated region
    $region2: #{tpu_custom_call.1} parent=1 // pred_check
      _
    $region3: #{tpu_custom_call.1} parent=1 // pred_check_branch
      %12 = sbr.rel (0) target = $region5
    $region4: #{tpu_custom_call.1} parent=1 // pred_region
      %s14 = ssub.s32 512, 512
      %15 = vsyncadd [#allocation3], %s14
      %s16 = sshll.u32 [#allocation2], 4
      %s17 = int_to_ptr.vmem [resolvable:$true] %s16
      %22 = dma.hbm_to_vmem [thread:$0]  %s0, 512, %s17, [#allocation3], 128, 128, 8
    $region5: #{tpu_custom_call.1} parent=1 // pred_fallthru
      _
    // Predicated region
    $region6: #{tpu_custom_call.1} parent=1 // pred_check
      _
    $region7: #{tpu_custom_call.1} parent=1 // pred_check_branch
      %24 = sbr.rel (0) target = $region9
    $region8: #{tpu_custom_call.1} parent=1 // pred_region
      %s26 = ssub.s32 1024, 1024
      %27 = vsyncadd [#allocation6], %s26
      %s28 = sshll.u32 [#allocation5], 4
      %s29 = int_to_ptr.vmem [resolvable:$true] %s28
      %34 = dma.hbm_to_vmem [thread:$0]  %s1, 1024, %s29, [#allocation6], 256, 256, 16
    $region9: #{tpu_custom_call.1} parent=1 // pred_fallthru
      _
    // Predicated region
    $region10: #{tpu_custom_call.1} parent=1 // pred_check
      _
    $region11: #{tpu_custom_call.1} parent=1 // pred_check_branch
      %36 = sbr.rel (0) target = $region13
    $region12: #{tpu_custom_call.1} parent=1 // pred_region
      _
    $region13: #{tpu_custom_call.1} parent=1 // pred_fallthru
      _
    // Predicated region
    $region14: #{tpu_custom_call.1} parent=1 // pred_check
      _
    $region15: #{tpu_custom_call.1} parent=1 // pred_check_branch
      %38 = sbr.rel (0) target = $region17
    $region16: #{tpu_custom_call.1} parent=1 // pred_region
      %39 = dma.done [#allocation3], 512
    $region17: #{tpu_custom_call.1} parent=1 // pred_fallthru
      _
    // Predicated region
    $region18: #{tpu_custom_call.1} parent=1 // pred_check
      _
    $region19: #{tpu_custom_call.1} parent=1 // pred_check_branch
      %41 = sbr.rel (0) target = $region21
    $region20: #{tpu_custom_call.1} parent=1 // pred_region
      %42 = dma.done [#allocation6], 1024
    $region21: #{tpu_custom_call.1} parent=1 // pred_fallthru
      _
    %v43 = vld [vmem:[#allocation2] sm:$0xff]
    %v44 = vld [vmem:[#allocation2 + $0x8] sm:$0xff]
    %v45 = vld [vmem:[#allocation2 + $0x10] sm:$0xff]
    %v46 = vld [vmem:[#allocation2 + $0x18] sm:$0xff]
    %v47 = vld [vmem:[#allocation5] sm:$0xff]
    %v48 = vld [vmem:[#allocation5 + $0x8] sm:$0xff]
    %v49 = vld [vmem:[#allocation5 + $0x10] sm:$0xff]
    %v50 = vld [vmem:[#allocation5 + $0x18] sm:$0xff]
    %v51 = vld [vmem:[#allocation5 + $0x20] sm:$0xff]
    %v52 = vld [vmem:[#allocation5 + $0x28] sm:$0xff]
    %v53 = vld [vmem:[#allocation5 + $0x30] sm:$0xff]
    %v54 = vld [vmem:[#allocation5 + $0x38] sm:$0xff]
    %v55 = vld [vmem:[%s2] sm:$0x3]
    %v57 = vlaneseq
    %v58 = vshrl.u32 %v57, 7
    %v59 = vsub.s32 0, %v58
    %v60 = vrot.slane %v55, %v59
    %v61 = vlaneseq
    %v62 = vshrl.u32 %v61, 7
    %v63 = vsub.s32 1, %v62
    %v64 = vrot.slane %v55, %v63
    %vm67 = vcmask 261120
    %v69 = vsel %vm67, %v43, 0
    %v72 = vsel %vm67, %v44, 0
    %v75 = vsel %vm67, %v45, 0
    %v78 = vsel %vm67, %v46, 0
    %80 = vmatprep.subr.mxu0 0.0
    %81 = vmatpush1.msra.mxu0 0.0
    %82 = vmatprep.subr.mxu0 0.0
    %83 = vmatpush1.msra.mxu0 0.0
    %84 = vmatprep.subr.mxu0 0.0
    %85 = vmatpush1.msra.mxu0 0.0
    %86 = vmatprep.subr.mxu0 0.0
    %87 = vmatpush1.msra.mxu0 0.0
    %88 = vmatprep.subr.mxu0 0.0
    %89 = vmatpush1.msra.mxu0 0.0
    %90 = vmatprep.subr.mxu0 0.0
    %91 = vmatpush1.msra.mxu0 0.0
    %92 = vmatprep.subr.mxu0 0.0
    %93 = vmatpush1.msra.mxu0 0.0
    %94 = vmatprep.subr.mxu0 0.0
    %95 = vmatpush1.msra.mxu0 0.0
    %96 = vmatprep.subr.mxu0 0.0
    %97 = vmatpush1.msra.mxu0 0.0
    %98 = vmatprep.subr.mxu0 0.0
    %99 = vmatpush1.msra.mxu0 0.0
    %100 = vmatprep.subr.mxu0 0.0
    %101 = vmatpush1.msra.mxu0 0.0
    %102 = vmatprep.subr.mxu0 0.0
    %103 = vmatpush1.msra.mxu0 0.0
    %104 = vmatprep.subr.mxu0 %v54
    %105 = vmatpush1.msra.mxu0 %v53
    %106 = vmatprep.subr.mxu0 %v52
    %107 = vmatpush1.msra.mxu0 %v51
    %108 = vmatprep.subr.mxu0 %v50
    %109 = vmatpush1.msra.mxu0 %v49
    %110 = vmatprep.subr.mxu0 %v48
    %111 = vmatpush1.msra.mxu0 %v47
    %112 = vmatprep.subr.mxu0 0.0
    %113 = vmatpush2.msra.mxu0 0.0
    %114 = vmatprep.subr.mxu0 0.0
    %115 = vmatpush2.msra.mxu0 0.0
    %116 = vmatprep.subr.mxu0 0.0
    %117 = vmatpush2.msra.mxu0 0.0
    %118 = vmatprep.subr.mxu0 0.0
    %119 = vmatpush2.msra.mxu0 0.0
    %120 = vmatprep.subr.mxu0 0.0
    %121 = vmatpush2.msra.mxu0 0.0
    %122 = vmatprep.subr.mxu0 0.0
    %123 = vmatpush2.msra.mxu0 0.0
    %124 = vmatprep.subr.mxu0 0.0
    %125 = vmatpush2.msra.mxu0 0.0
    %126 = vmatprep.subr.mxu0 0.0
    %127 = vmatpush2.msra.mxu0 0.0
    %128 = vmatprep.subr.mxu0 0.0
    %129 = vmatpush2.msra.mxu0 0.0
    %130 = vmatprep.subr.mxu0 0.0
    %131 = vmatpush2.msra.mxu0 0.0
    %132 = vmatprep.subr.mxu0 0.0
    %133 = vmatpush2.msra.mxu0 0.0
    %134 = vmatprep.subr.mxu0 0.0
    %135 = vmatpush2.msra.mxu0 0.0
    %136 = vmatprep.subr.mxu0 0.0
    %137 = vmatpush2.msra.mxu0 0.0
    %138 = vmatprep.subr.mxu0 0.0
    %139 = vmatpush2.msra.mxu0 0.0
    %140 = vmatprep.subr.mxu0 0.0
    %141 = vmatpush2.msra.mxu0 0.0
    %142 = vmatprep.subr.mxu0 0.0
    %143 = vmatpush2.msra.mxu0 0.0
    %144 = vmatprep.mubr.f32.mxu0 0.0
    %145 = vmatmul.mubr.f32.gmra.mxu0 %v69
    %v146 = vpop.f32.mrf.mxu0
    %v147 = vadd.f32 %v60, %v146
    %v148 = vpop.f32.mrf.mxu0
    %v149 = vadd.f32 %v64, %v148
    %150 = vmatprep.mubr.f32.mxu0 0.0
    %151 = vmatmul.mubr.f32.gmra.mxu0 %v72
    %v152 = vpop.f32.mrf.mxu0
    %v153 = vadd.f32 %v60, %v152
    %v154 = vpop.f32.mrf.mxu0
    %v155 = vadd.f32 %v64, %v154
    %156 = vmatprep.mubr.f32.mxu0 0.0
    %157 = vmatmul.mubr.f32.gmra.mxu0 %v75
    %v158 = vpop.f32.mrf.mxu0
    %v159 = vadd.f32 %v60, %v158
    %v160 = vpop.f32.mrf.mxu0
    %v161 = vadd.f32 %v64, %v160
    %162 = vmatprep.mubr.f32.mxu0 0.0
    %163 = vmatmul.mubr.f32.gmra.mxu0 %v78
    %v164 = vpop.f32.mrf.mxu0
    %v165 = vadd.f32 %v60, %v164
    %v166 = vpop.f32.mrf.mxu0
    %v167 = vadd.f32 %v64, %v166
    %168 = vdwg.mxu0
    %v169 = vxor.u32 %v147, 2147483648
    %v170 = vxor.u32 %v153, 2147483648
    %v171 = vxor.u32 %v159, 2147483648
    %v172 = vxor.u32 %v165, 2147483648
    %v173 = vmul.f32 %v169, 1.442695
    %v174 = vpow.pop %v173
    %v175 = vmul.f32 %v170, 1.442695
    %v176 = vpow.pop %v175
    %v177 = vmul.f32 %v171, 1.442695
    %v178 = vpow.pop %v177
    %v179 = vmul.f32 %v172, 1.442695
    %v180 = vpow.pop %v179
    %v181 = vadd.f32 %v174, 1.0
    %v182 = vadd.f32 %v176, 1.0
    %v183 = vadd.f32 %v178, 1.0
    %v184 = vadd.f32 %v180, 1.0
    %v185 = vrcp.pop %v181
    %v186 = vmul.f32 1.0, %v185
    %v187 = vrcp.pop %v182
    %v188 = vmul.f32 1.0, %v187
    %v189 = vrcp.pop %v183
    %v190 = vmul.f32 1.0, %v189
    %v191 = vrcp.pop %v184
    %v192 = vmul.f32 1.0, %v191
    %v193 = vtanh.pop %v149
    %v194 = vtanh.pop %v155
    %v195 = vtanh.pop %v161
    %v196 = vtanh.pop %v167
    %v197 = vmul.f32 %v186, %v193
    %v198 = vmul.f32 %v188, %v194
    %v199 = vmul.f32 %v190, %v195
    %v200 = vmul.f32 %v192, %v196
    %v201 = vrot.slane %v197, 4
    %v202 = vadd.f32 %v197, %v201
    %v203 = vrot.slane %v202, 2
    %v204 = vadd.f32 %v202, %v203
    %v205 = vrot.slane %v204, 1
    %v206 = vadd.f32 %v204, %v205
    %v207 = vrot.slane %v198, 4
    %v208 = vadd.f32 %v198, %v207
    %v209 = vrot.slane %v208, 2
    %v210 = vadd.f32 %v208, %v209
    %v211 = vrot.slane %v210, 1
    %v212 = vadd.f32 %v210, %v211
    %v213 = vrot.slane %v199, 4
    %v214 = vadd.f32 %v199, %v213
    %v215 = vrot.slane %v214, 2
    %v216 = vadd.f32 %v214, %v215
    %v217 = vrot.slane %v216, 1
    %v218 = vadd.f32 %v216, %v217
    %v219 = vrot.slane %v200, 4
    %v220 = vadd.f32 %v200, %v219
    %v221 = vrot.slane %v220, 2
    %v222 = vadd.f32 %v220, %v221
    %v223 = vrot.slane %v222, 1
    %v224 = vadd.f32 %v222, %v223
    %v225 = vtanh.pop %v206
    %v226 = vtanh.pop %v212
    %v227 = vtanh.pop %v218
    %v228 = vtanh.pop %v224
    %vm233 = vcmask 1041409
    %v234 = vsel %vm233, %v226, %v225
    %vm235 = vcmask 1042434
    %v236 = vsel %vm235, %v227, %v234
    %vm237 = vcmask 1043459
    %v238 = vsel %vm237, %v228, %v236
    %240 = vst [vmem:[#allocation7] sm:$0xf] %v238
    // Predicated region
    $region22: #{tpu_custom_call.1} parent=1 // pred_check
      _
    $region23: #{tpu_custom_call.1} parent=1 // pred_check_branch
      %242 = sbr.rel (0) target = $region25
    $region24: #{tpu_custom_call.1} parent=1 // pred_region
      %s244 = ssub.s32 64, 64
      %245 = vsyncadd [#allocation4], %s244
      %s247 = sshll.u32 [#allocation7], 4
      %s248 = int_to_ptr.vmem [resolvable:$true] %s247
      %250 = dma.vmem_to_hbm [thread:$0]  %s248, 64, %s3, [#allocation4]
    $region25: #{tpu_custom_call.1} parent=1 // pred_fallthru
      _
    // Predicated region
    $region26: #{tpu_custom_call.1} parent=1 // pred_check
      _
    $region27: #{tpu_custom_call.1} parent=1 // pred_check_branch
      %252 = sbr.rel (0) target = $region29
    $region28: #{tpu_custom_call.1} parent=1 // pred_region
      %253 = dma.done [#allocation4], 64
    $region29: #{tpu_custom_call.1} parent=1 // pred_fallthru
      _
    %254 = vsyncpa [#allocation3], 1
    %255 = vsyncpa [#allocation6], 1
    %256 = vsyncpa [#allocation4], 1

</llo_original>
